<compile_context>
chip_gen: v7x
topology: tpu7x:2x2x1
jax: 0.10.0
libtpu: 0.0.40
codegen_flags: <defaults>
</compile_context>

<pallas_src>
import functools

import jax
import jax.numpy as jnp
import numpy as np
from jax.experimental import pallas as pl
from jax.experimental.pallas import tpu as pltpu


# ---------------------------------------------------------------------------
# Host-side construction of the separable / Kronecker linear operators.
# ---------------------------------------------------------------------------
def _pool_matrix(in_size: int, k: int) -> np.ndarray:
    """Average-pool with kernel=stride=k, padding=0 as a (out, in) matrix."""
    out = (in_size - k) // k + 1
    m = np.zeros((out, in_size), np.float32)
    for o in range(out):
        m[o, o * k: o * k + k] = 1.0 / k
    return m


def _interp_matrix(out_size: int, in_size: int) -> np.ndarray:
    """Bilinear (1-D linear) resize, align_corners=True, as (out, in) matrix."""
    m = np.zeros((out_size, in_size), np.float32)
    if in_size == 1:
        m[:, 0] = 1.0
        return m
    scale = (in_size - 1) / (out_size - 1)
    for o in range(out_size):
        c = o * scale
        i0 = int(np.floor(c))
        i1 = min(i0 + 1, in_size - 1)
        w1 = c - i0
        m[o, i0] += 1.0 - w1
        m[o, i1] += w1
    return m


def _round_up(x: int, m: int) -> int:
    return ((x + m - 1) // m) * m


def _pick_ct(C: int, requested):
    """Channel tile: largest multiple of 8 <= min(128, C) that divides C."""
    if requested is not None:
        assert requested % 8 == 0 and C % requested == 0, (C, requested)
        return requested
    ct = min(128, C)
    ct -= ct % 8
    while ct >= 8 and C % ct != 0:
        ct -= 8
    assert ct >= 8, "in_channels must be a multiple of 8"
    return ct


def _default_vmem_limit_bytes() -> int:
    """~56 MiB on v7x (64 MiB phys), ~112 MiB on v5e/v6e (128 MiB phys)."""
    try:
        cap = int(pltpu.get_tpu_info().vmem_capacity_bytes)
        return min(cap - (8 << 20), 112 << 20)
    except Exception:  # conservative fallback, safe on every generation
        return 48 << 20


def _resident_spec(shape):
    """Grid-invariant operand: constant index_map, single pipeline buffer."""
    idx = lambda b, s: (0, 0)
    try:
        return pl.BlockSpec(shape, idx, pipeline_mode=pl.Buffered(1))
    except Exception:  # older jax without pipeline_mode: default buffering
        return pl.BlockSpec(shape, idx)


# ---------------------------------------------------------------------------
# Fused Pallas kernel.
# ---------------------------------------------------------------------------
def _pp_kernel(x_ref, pt_ref, wt_ref, sh_ref, mk_ref, uc_ref,
               o_ref, acc_ref, *, nc, ct, mm_dtype):
    s = pl.program_id(1)

    @pl.when(s == 0)
    def _():
        acc_ref[...] = jnp.zeros_like(acc_ref)

    @pl.when(s < nc)
    def _():
        x = x_ref[0]                                         # (ct, HWp) f32
        # identity / concat passthrough (lane-dense, unmasked vst)
        o_ref[0] = x
        # pooled(ct, QPp) = x @ PT     [K = HWp, MXU-friendly M = ct]
        pooled = jnp.dot(x.astype(mm_dtype), pt_ref[...],
                         preferred_element_type=jnp.float32)
        # 1x1 conv (BN scale folded): acc(C, QPp) += W_rows(ct, C)^T @ pooled
        r = pl.multiple_of(s * ct, ct)
        w = wt_ref[pl.ds(r, ct), :]                          # resident weights
        acc_ref[...] += jax.lax.dot_general(
            w.astype(mm_dtype), pooled.astype(mm_dtype),
            dimension_numbers=(((0,), (0,)), ((), ())),
            preferred_element_type=jnp.float32)

    @pl.when(s >= nc)
    def _():
        r = pl.multiple_of((s - nc) * ct, ct)
        y = acc_ref[pl.ds(r, ct), :]                         # (ct, QPp)
        # folded-BN shift + ReLU, zero cross-path / padded columns
        y = jnp.maximum(y + sh_ref[pl.ds(r, ct), :], 0.0) * mk_ref[pl.ds(r, ct), :]
        # bilinear upsample: z(ct, HWp) = y @ U   [lane-dense N = HWp]
        z = jnp.dot(y.astype(mm_dtype), uc_ref[...],
                    preferred_element_type=jnp.float32)
        o_ref[0] = z.astype(o_ref.dtype)


# ---------------------------------------------------------------------------
# PyramidPooling parameters (fusion_mode='cat', model_name='pspnet',
# is_batchnorm=True -> conv bias=False).
# ---------------------------------------------------------------------------
def init_params(key, in_channels: int, pool_sizes):
    n = len(pool_sizes)
    co = int(in_channels / n)
    eps = 1e-5
    params = []
    for _ in range(n):
        k0, k1, k2, key = jax.random.split(key, 4)
        wc = jax.random.normal(k0, (co, in_channels), jnp.float32) * 0.2
        gamma = 1.0 + 0.1 * jax.random.normal(k1, (co,), jnp.float32)
        beta = 0.1 * jax.random.normal(k2, (co,), jnp.float32)
        run_mean = jnp.zeros((co,), jnp.float32)
        run_var = jnp.ones((co,), jnp.float32)
        scale = gamma / jnp.sqrt(run_var + eps)
        shift = beta - run_mean * scale
        params.append({
            'Wc': wc,
            'scale': scale.reshape(co, 1),
            'shift': shift.reshape(co, 1),
        })
    return params


def pyramid_pooling(x, params, pool_sizes, *, ct=None,
                    compute_dtype=jnp.float32, vmem_limit_bytes=None):
    B, C, H, W = x.shape
    n = len(pool_sizes)
    Co = int(C / n)
    assert n * Co == C, "in_channels must be divisible by len(pool_sizes)"
    ct = _pick_ct(C, ct)
    nc = C // ct
    HW = H * W
    HWp = _round_up(HW, 128)            # lane-dense padding of the spatial axis
    mm_dtype = jnp.dtype(compute_dtype)
    if vmem_limit_bytes is None:
        vmem_limit_bytes = _default_vmem_limit_bytes()

    # Combined Kronecker pool / upsample operators (one matrix per direction).
    pts, us, blocks = [], [], []
    off = 0
    for ps in pool_sizes:
        kh, kw = int(H / ps), int(W / ps)
        ph = _pool_matrix(H, kh)                     # (q, H)
        pw = _pool_matrix(W, kw)                     # (p, W)
        uh = _interp_matrix(H, ph.shape[0])          # (H, q)
        uw = _interp_matrix(W, pw.shape[0])          # (W, p)
        P = np.kron(ph, pw)                          # (q*p, H*W)
        U = np.kron(uh, uw)                          # (H*W, q*p)
        pts.append(P.T)                              # (HW, qp)
        us.append(U.T)                               # (qp, HW)
        qp = P.shape[0]
        blocks.append((off, qp))
        off += qp
    QP = off
    QPp = _round_up(max(QP, 1), 128)                 # unmasked lane stores

    PT = np.zeros((HWp, QPp), np.float32)
    PT[:HW, :QP] = np.concatenate(pts, axis=1)
    UC = np.zeros((QPp, HWp), np.float32)
    UC[:QP, :HW] = np.concatenate(us, axis=0)

    # Stacked, BN-scale-folded 1x1-conv weights (transposed), shift, path mask.
    WT = np.zeros((C, C), np.float32)                # (C_in, n*Co)
    SH = np.zeros((C, 1), np.float32)
    MK = np.zeros((C, QPp), np.float32)
    for i, prm in enumerate(params):
        wsc = np.asarray(prm['Wc']) * np.asarray(prm['scale'])   # (Co, C)
        WT[:, i * Co:(i + 1) * Co] = wsc.T
        SH[i * Co:(i + 1) * Co, 0] = np.asarray(prm['shift'])[:, 0]
        o0, qp = blocks[i]
        MK[i * Co:(i + 1) * Co, o0:o0 + qp] = 1.0

    x_flat = x.reshape(B, C, HW)
    if HWp != HW:
        x_flat = jnp.pad(x_flat, ((0, 0), (0, 0), (0, HWp - HW)))

    kernel = functools.partial(_pp_kernel, nc=nc, ct=ct, mm_dtype=mm_dtype)

    out = pl.pallas_call(
        kernel,
        out_shape=jax.ShapeDtypeStruct((B, 2 * C, HWp), x.dtype),
        grid_spec=pltpu.PrefetchScalarGridSpec(
            num_scalar_prefetch=0,
            grid=(B, 2 * nc),
            in_specs=[
                # x channel tile; clamped so phase-2 steps re-use (no re-DMA)
                pl.BlockSpec((1, ct, HWp),
                             lambda b, s: (b, jnp.minimum(s, nc - 1), 0)),
                _resident_spec((HWp, QPp)),          # PT  (pool operator)
                _resident_spec((C, C)),              # WT  (folded conv weights)
                _resident_spec((C, 1)),              # SH  (folded BN shift)
                _resident_spec((C, QPp)),            # MK  (per-path column mask)
                _resident_spec((QPp, HWp)),          # UC  (upsample operator)
            ],
            out_specs=pl.BlockSpec((1, ct, HWp), lambda b, s: (b, s, 0)),
            scratch_shapes=[pltpu.VMEM((C, QPp), jnp.float32)],
        ),
        compiler_params=pltpu.CompilerParams(
            dimension_semantics=("parallel", "arbitrary"),
            vmem_limit_bytes=vmem_limit_bytes,
        ),
    )(x_flat,
      jnp.asarray(PT, dtype=mm_dtype),
      jnp.asarray(WT, dtype=mm_dtype),
      jnp.asarray(SH),
      jnp.asarray(MK),
      jnp.asarray(UC, dtype=mm_dtype))

    if HWp != HW:
        out = out[:, :, :HW]
    return out.reshape(B, 2 * C, H, W)


# ---------------------------------------------------------------------------
# Independent pure-JAX reference (correctness check).
# ---------------------------------------------------------------------------
def _upsample_bilinear_ac_ref(y, H, W):
    _, _, hi, wi = y.shape

    def coords(out, inn):
        if inn == 1:
            return jnp.zeros((out,), jnp.float32)
        return jnp.arange(out, dtype=jnp.float32) * ((inn - 1) / (out - 1))

    cy, cx = coords(H, hi), coords(W, wi)
    y0 = jnp.floor(cy).astype(jnp.int32)
    y1 = jnp.minimum(y0 + 1, hi - 1)
    x0 = jnp.floor(cx).astype(jnp.int32)
    x1 = jnp.minimum(x0 + 1, wi - 1)
    wy = (cy - y0)[None, None, :, None]
    wx = (cx - x0)[None, None, None, :]
    g = lambda yy, xx: y[:, :, yy, :][:, :, :, xx]
    top = g(y0, x0) * (1 - wx) + g(y0, x1) * wx
    bot = g(y1, x0) * (1 - wx) + g(y1, x1) * wx
    return top * (1 - wy) + bot * wy


def pyramid_pooling_ref(x, params, pool_sizes):
    B, C, H, W = x.shape
    outs = [x]
    for p, ps in zip(params, pool_sizes):
        kh, kw = int(H / ps), int(W / ps)
        pooled = jax.lax.reduce_window(
            x, 0.0, jax.lax.add, (1, 1, kh, kw), (1, 1, kh, kw), 'VALID'
        ) / float(kh * kw)
        y = jnp.einsum('oc,bcqp->boqp', p['Wc'], pooled)
        y = y * p['scale'][:, 0][None, :, None, None] \
              + p['shift'][:, 0][None, :, None, None]
        y = jnp.maximum(y, 0.0)
        outs.append(_upsample_bilinear_ac_ref(y, H, W))
    return jnp.concatenate(outs, axis=1)


# ---------------------------------------------------------------------------
if __name__ == "__main__":
    pool_sizes = (1, 2, 3, 6)           # PSPNet-style pyramid
    key = jax.random.PRNGKey(0)
    kx, kp = jax.random.split(key)

    # Test 1: H*W already a multiple of 128.
    B, C, H, W = 2, 16, 16, 16
    x = jax.random.normal(kx, (B, C, H, W), jnp.float32)
    params = init_params(kp, C, pool_sizes)

    out = jax.block_until_ready(pyramid_pooling(x, params, pool_sizes))
    assert out.shape == (B, 2 * C, H, W), out.shape
    ref = jax.block_until_ready(pyramid_pooling_ref(x, params, pool_sizes))
    np.testing.assert_allclose(np.asarray(out), np.asarray(ref),
                               rtol=1e-4, atol=1e-4)

    # Test 2: H*W NOT a multiple of 128 (exercises the spatial padding path).
    H2 = W2 = 12
    x2 = jax.random.normal(kx, (B, C, H2, W2), jnp.float32)
    out2 = jax.block_until_ready(pyramid_pooling(x2, params, pool_sizes))
    assert out2.shape == (B, 2 * C, H2, W2), out2.shape
    ref2 = jax.block_until_ready(pyramid_pooling_ref(x2, params, pool_sizes))
    np.testing.assert_allclose(np.asarray(out2), np.asarray(ref2),
                               rtol=1e-4, atol=1e-4)

    print("KERNEL_OK")
</pallas_src>

<mosaic_0001>
module attributes {stable_mosaic.version = 11 : i64} {
  func.func @_pp_kernel(%arg0: i32, %arg1: i32, %arg2: memref<1x16x256xf32, #tpu.memory_space<vmem>>, %arg3: memref<256x128xf32, #tpu.memory_space<vmem>>, %arg4: memref<16x16xf32, #tpu.memory_space<vmem>>, %arg5: memref<16x1xf32, #tpu.memory_space<vmem>>, %arg6: memref<16x128xf32, #tpu.memory_space<vmem>>, %arg7: memref<128x256xf32, #tpu.memory_space<vmem>>, %arg8: memref<1x16x256xf32, #tpu.memory_space<vmem>>, %arg9: memref<16x128xf32, #tpu.memory_space<vmem>>) attributes {dimension_semantics = [#tpu.dimension_semantics<parallel>, #tpu.dimension_semantics<arbitrary>], iteration_bounds = array<i64: 2, 2>, scalar_prefetch = 0 : i64, scratch_operands = 1 : i64, tpu.core_type = #tpu.core_type<tc>, window_params = [{transform_indices = @transform_0, window_bounds = array<i64: 1, 16, 256>}, {pipeline_mode = #tpu.pipeline_mode<synchronous>, transform_indices = @transform_1, window_bounds = array<i64: 256, 128>}, {pipeline_mode = #tpu.pipeline_mode<synchronous>, transform_indices = @transform_2, window_bounds = array<i64: 16, 16>}, {pipeline_mode = #tpu.pipeline_mode<synchronous>, transform_indices = @transform_3, window_bounds = array<i64: 16, 1>}, {pipeline_mode = #tpu.pipeline_mode<synchronous>, transform_indices = @transform_4, window_bounds = array<i64: 16, 128>}, {pipeline_mode = #tpu.pipeline_mode<synchronous>, transform_indices = @transform_5, window_bounds = array<i64: 128, 256>}, {transform_indices = @transform_6, window_bounds = array<i64: 1, 16, 256>}]} {
    %c0_i32 = arith.constant 0 : i32
    %0 = arith.cmpi eq, %arg1, %c0_i32 : i32
    %1 = arith.extui %0 : i1 to i32
    %c0_i32_0 = arith.constant 0 : i32
    %2 = arith.cmpi ne, %1, %c0_i32_0 : i32
    scf.if %2 {
      %cst = arith.constant 0.000000e+00 : f32
      %9 = vector.broadcast %cst : f32 to vector<16x128xf32>
      %c0 = arith.constant 0 : index
      %c0_4 = arith.constant 0 : index
      %10 = vector.load %arg9[%c0, %c0_4] : memref<16x128xf32, #tpu.memory_space<vmem>>, vector<16x128xf32>
      tpu.vector_store %arg9[%c0, %c0_4], %9 {strides = array<i32>} : memref<16x128xf32, #tpu.memory_space<vmem>>, vector<16x128xf32>,
    } else {
    }
    %c1_i32 = arith.constant 1 : i32
    %3 = arith.cmpi slt, %arg1, %c1_i32 : i32
    %4 = arith.extui %3 : i1 to i32
    %c0_i32_1 = arith.constant 0 : i32
    %5 = arith.cmpi ne, %4, %c0_i32_1 : i32
    scf.if %5 {
      %c0 = arith.constant 0 : index
      %c0_4 = arith.constant 0 : index
      %c0_5 = arith.constant 0 : index
      %9 = vector.load %arg2[%c0, %c0_4, %c0_5] : memref<1x16x256xf32, #tpu.memory_space<vmem>>, vector<1x16x256xf32>
      %10 = vector.shape_cast %9 : vector<1x16x256xf32> to vector<16x256xf32>
      %c0_6 = arith.constant 0 : index
      %c0_7 = arith.constant 0 : index
      %c0_8 = arith.constant 0 : index
      %11 = vector.load %arg8[%c0_6, %c0_7, %c0_8] : memref<1x16x256xf32, #tpu.memory_space<vmem>>, vector<1x16x256xf32>
      %12 = vector.shape_cast %11 : vector<1x16x256xf32> to vector<16x256xf32>
      %13 = vector.shape_cast %10 : vector<16x256xf32> to vector<1x16x256xf32>
      tpu.vector_store %arg8[%c0_6, %c0_7, %c0_8], %13 {strides = array<i32>} : memref<1x16x256xf32, #tpu.memory_space<vmem>>, vector<1x16x256xf32>,
      %c0_9 = arith.constant 0 : index
      %c0_10 = arith.constant 0 : index
      %14 = vector.load %arg3[%c0_9, %c0_10] : memref<256x128xf32, #tpu.memory_space<vmem>>, vector<256x128xf32>
      %cst = arith.constant dense<0.000000e+00> : vector<16x128xf32>
      %15 = tpu.matmul %10, %14, %cst {dimension_numbers = #tpu.dot_dimension_numbers<[1], [0], [0], [1], [0, 0, 1, 1], [], []>} : vector<16x256xf32>, vector<256x128xf32>, vector<16x128xf32> -> vector<16x128xf32>
      %c16_i32 = arith.constant 16 : i32
      %16 = arith.muli %arg1, %c16_i32 : i32
      %17 = tpu.assume_multiple %16, 16 : i32
      %18 = arith.index_cast %17 : i32 to index
      %c0_11 = arith.constant 0 : index
      %19 = vector.load %arg4[%18, %c0_11] : memref<16x16xf32, #tpu.memory_space<vmem>>, vector<16x16xf32>
      %c0_12 = arith.constant 0 : index
      %c0_13 = arith.constant 0 : index
      %20 = vector.load %arg9[%c0_12, %c0_13] : memref<16x128xf32, #tpu.memory_space<vmem>>, vector<16x128xf32>
      %cst_14 = arith.constant dense<0.000000e+00> : vector<16x128xf32>
      %21 = tpu.matmul %19, %15, %cst_14 {dimension_numbers = #tpu.dot_dimension_numbers<[0], [0], [1], [1], [0, 1, 1, 1], [], []>} : vector<16x16xf32>, vector<16x128xf32>, vector<16x128xf32> -> vector<16x128xf32>
      %22 = arith.addf %20, %21 : vector<16x128xf32>
      %c0_15 = arith.constant 0 : index
      %c0_16 = arith.constant 0 : index
      %23 = vector.load %arg9[%c0_15, %c0_16] : memref<16x128xf32, #tpu.memory_space<vmem>>, vector<16x128xf32>
      tpu.vector_store %arg9[%c0_15, %c0_16], %22 {strides = array<i32>} : memref<16x128xf32, #tpu.memory_space<vmem>>, vector<16x128xf32>,
    } else {
    }
    %c1_i32_2 = arith.constant 1 : i32
    %6 = arith.cmpi sge, %arg1, %c1_i32_2 : i32
    %7 = arith.extui %6 : i1 to i32
    %c0_i32_3 = arith.constant 0 : i32
    %8 = arith.cmpi ne, %7, %c0_i32_3 : i32
    scf.if %8 {
      %c1_i32_4 = arith.constant 1 : i32
      %9 = arith.subi %arg1, %c1_i32_4 : i32
      %c16_i32 = arith.constant 16 : i32
      %10 = arith.muli %9, %c16_i32 : i32
      %11 = tpu.assume_multiple %10, 16 : i32
      %12 = arith.index_cast %11 : i32 to index
      %c0 = arith.constant 0 : index
      %13 = vector.load %arg9[%12, %c0] : memref<16x128xf32, #tpu.memory_space<vmem>>, vector<16x128xf32>
      %14 = arith.index_cast %11 : i32 to index
      %c0_5 = arith.constant 0 : index
      %15 = vector.load %arg5[%14, %c0_5] : memref<16x1xf32, #tpu.memory_space<vmem>>, vector<16x1xf32>
      %16 = vector.broadcast %15 : vector<16x1xf32> to vector<16x128xf32>
      %17 = arith.addf %13, %16 : vector<16x128xf32>
      %cst = arith.constant 0.000000e+00 : f32
      %18 = vector.broadcast %cst : f32 to vector<16x128xf32>
      %19 = arith.maximumf %17, %18 : vector<16x128xf32>
      %20 = arith.index_cast %11 : i32 to index
      %c0_6 = arith.constant 0 : index
      %21 = vector.load %arg6[%20, %c0_6] : memref<16x128xf32, #tpu.memory_space<vmem>>, vector<16x128xf32>
      %22 = arith.mulf %19, %21 : vector<16x128xf32>
      %c0_7 = arith.constant 0 : index
      %c0_8 = arith.constant 0 : index
      %23 = vector.load %arg7[%c0_7, %c0_8] : memref<128x256xf32, #tpu.memory_space<vmem>>, vector<128x256xf32>
      %cst_9 = arith.constant dense<0.000000e+00> : vector<16x256xf32>
      %24 = tpu.matmul %22, %23, %cst_9 {dimension_numbers = #tpu.dot_dimension_numbers<[1], [0], [0], [1], [0, 0, 1, 1], [], []>} : vector<16x128xf32>, vector<128x256xf32>, vector<16x256xf32> -> vector<16x256xf32>
      %c0_10 = arith.constant 0 : index
      %c0_11 = arith.constant 0 : index
      %c0_12 = arith.constant 0 : index
      %25 = vector.load %arg8[%c0_10, %c0_11, %c0_12] : memref<1x16x256xf32, #tpu.memory_space<vmem>>, vector<1x16x256xf32>
      %26 = vector.shape_cast %25 : vector<1x16x256xf32> to vector<16x256xf32>
      %27 = vector.shape_cast %24 : vector<16x256xf32> to vector<1x16x256xf32>
      tpu.vector_store %arg8[%c0_10, %c0_11, %c0_12], %27 {strides = array<i32>} : memref<1x16x256xf32, #tpu.memory_space<vmem>>, vector<1x16x256xf32>,
    } else {
    }
    return
  }
  func.func @transform_0(%arg0: i32, %arg1: i32) -> (i32, i32, i32) {
    %c0_i32 = arith.constant 0 : i32
    %0 = arith.minsi %arg1, %c0_i32 : i32
    %c0_i32_0 = arith.constant 0 : i32
    %c0_i32_1 = arith.constant 0 : i32
    return %arg0, %0, %c0_i32_0 : i32, i32, i32
  }
  func.func @transform_1(%arg0: i32, %arg1: i32) -> (i32, i32) {
    %c0_i32 = arith.constant 0 : i32
    %c0_i32_0 = arith.constant 0 : i32
    %c0_i32_1 = arith.constant 0 : i32
    return %c0_i32, %c0_i32_0 : i32, i32
  }
  func.func @transform_2(%arg0: i32, %arg1: i32) -> (i32, i32) {
    %c0_i32 = arith.constant 0 : i32
    %c0_i32_0 = arith.constant 0 : i32
    %c0_i32_1 = arith.constant 0 : i32
    return %c0_i32, %c0_i32_0 : i32, i32
  }
  func.func @transform_3(%arg0: i32, %arg1: i32) -> (i32, i32) {
    %c0_i32 = arith.constant 0 : i32
    %c0_i32_0 = arith.constant 0 : i32
    %c0_i32_1 = arith.constant 0 : i32
    return %c0_i32, %c0_i32_0 : i32, i32
  }
  func.func @transform_4(%arg0: i32, %arg1: i32) -> (i32, i32) {
    %c0_i32 = arith.constant 0 : i32
    %c0_i32_0 = arith.constant 0 : i32
    %c0_i32_1 = arith.constant 0 : i32
    return %c0_i32, %c0_i32_0 : i32, i32
  }
  func.func @transform_5(%arg0: i32, %arg1: i32) -> (i32, i32) {
    %c0_i32 = arith.constant 0 : i32
    %c0_i32_0 = arith.constant 0 : i32
    %c0_i32_1 = arith.constant 0 : i32
    return %c0_i32, %c0_i32_0 : i32, i32
  }
  func.func @transform_6(%arg0: i32, %arg1: i32) -> (i32, i32, i32) {
    %c0_i32 = arith.constant 0 : i32
    %c0_i32_0 = arith.constant 0 : i32
    return %arg0, %arg1, %c0_i32 : i32, i32, i32
  }
}

</mosaic_0001>

<llo_original>
// kernel: tpu_custom_call.1
$region0: #{tpu_custom_call.1}
  #allocation0 [shape = 'u32[]', space=smem, size = 0x4, offset = 0x4, fixed_abs, tag = 'smem constant byte address 0x4 - core index']
  #allocation1 [shape = 'u32[144,128]{1,0:T(1,128)}', space=vmem, size = 0x12000, scoped, tag = 'internal scratch']
  #allocation2 [shape = 'f32[16,128]{1,0:T(8,128)}', space=vmem, size = 0x2000, scoped, tag = 'scratch operand']
  %s0 = inlined_call_operand.hbm [shape: f32[2,16,256], index: 0, kind: input, shape index: {}]
  %s1 = inlined_call_operand.hbm [shape: f32[256,128], index: 1, kind: input, shape index: {}]
  %s2 = inlined_call_operand.vmem [shape: f32[16,16], index: 2, kind: input, shape index: {}]
  %s3 = inlined_call_operand.vmem [shape: f32[16,1], index: 3, kind: input, shape index: {}]
  %s4 = inlined_call_operand.vmem [shape: f32[16,128], index: 4, kind: input, shape index: {}]
  %s5 = inlined_call_operand.hbm [shape: f32[128,256], index: 5, kind: input, shape index: {}]
  %s6 = inlined_call_operand.hbm [shape: f32[2,32,256], index: 6, kind: output, shape index: {}]
  %s7 = sld [smem:[#allocation0]]
  $region81: #{tpu_custom_call.1} parent=0
    _
  %s9 = ssub.s32 1, %s7
  %s10 = scalar_select 0, %s9, %s7
  $region1: #{tpu_custom_call.1} parent=0
    #allocation3 [shape = 'u8[32768]{0}', space=vmem, size = 0x8000, scoped, tag = 'input window, operand 0']
    #allocation4 [shape = 's32[2]{0}', space=sflag, size = 0x8, scoped, tag = 'scoped memory for tpu_custom_call.1']
    #allocation5 [shape = 's32[2]{0}', space=sflag, size = 0x8, scoped, tag = 'scoped memory for tpu_custom_call.1']
    #allocation6 [shape = 'u8[131072]{0}', space=vmem, size = 0x20000, scoped, tag = 'input window, operand 1, single buffered']
    #allocation7 [shape = 's32[1]{0}', space=sflag, size = 0x4, scoped, tag = 'scoped memory for tpu_custom_call.1']
    #allocation8 [shape = 'u8[131072]{0}', space=vmem, size = 0x20000, scoped, tag = 'input window, operand 5, single buffered']
    #allocation9 [shape = 'u8[32768]{0}', space=vmem, size = 0x8000, scoped, tag = 'output window, operand 0']
    %11 = vsyncpa [#allocation4], 0
    %s12 = scalar_lea.sflag [#allocation4], 1
    %13 = vsyncpa %s12, 0
    %14 = vsyncpa [#allocation7], 0
    %15 = vsyncpa [#allocation5], 0
    %s16 = scalar_lea.sflag [#allocation5], 1
    %17 = vsyncpa %s16, 0
    loop: start=0, step=1, limit=6
    $region2: #{tpu_custom_call.1} parent=1 // loop_pre_header
      _
    $region3: #{tpu_custom_call.1} parent=1 // loop_header
      %s19 = sphi 0, %s23
      %p20 = scmp.ge.s32.totalorder %s19, 6
      %s26 = sphi 0, %s38
      %s27 = sphi 0, %s34
      %s28 = sphi 0, %s26
      %s29 = sphi 0, %s27
      %s30 = sphi 0, %s28
      %s31 = sphi 0, %s29
      %s47 = sphi 0, %s49
      %s50 = sphi 0, %s47
      %s51 = sphi 0, %s50
      %s67 = sphi 0, %s51
      %s71 = sphi 0, %s71
      %s73 = sphi 0, %s71
      %s74 = sphi 0, %s73
      %s88 = sphi 0, %s74
      %s92 = sphi 0, %s92
      %s94 = sphi 0, %s92
      %s95 = sphi 0, %s94
      %s109 = sphi 0, %s95
      %s113 = sphi 0, %s113
      %s115 = sphi 0, %s113
      %s116 = sphi 0, %s115
      %s130 = sphi 0, %s116
      %s134 = sphi 0, %s134
      %s136 = sphi 0, %s134
      %s137 = sphi 0, %s136
      %s151 = sphi 0, %s137
      %s155 = sphi 0, %s155
      %s157 = sphi 0, %s155
      %s158 = sphi 0, %s157
      %s172 = sphi 0, %s158
      %s180 = sphi 0, %s182
      %s183 = sphi 0, %s180
      %s184 = sphi 0, %s183
      %s200 = sphi 0, %s184
    $region4: #{tpu_custom_call.1} parent=1 // loop_header_branch
      %22 = sbr.rel (%p20) target = $region8
    $region5: #{tpu_custom_call.1} parent=1 // loop_body
      %s24 = ssub.s32 %s19, 1
      %s25 = ssub.s32 %s19, 2
      %s32 = sadd.s32 1, %s27
      %p33 = scmp.ge.s32.totalorder %s32, 2
      %s34 = scalar_select %p33, 0, %s32
      %s35 = sadd.s32 1, %s26
      %s36 = scalar_select %p33, %s35, %s26
      %p37 = scmp.ge.s32.totalorder %s36, 2
      %s38 = scalar_select %p37, 0, %s36
      %p39 = scmp.lt.s32.totalorder %s27, 0
      %s40 = scalar_select %p39, %s27, 0
      %p41 = scmp.lt.s32.totalorder %s34, 0
      %s42 = scalar_select %p41, %s34, 0
      %s43 = ssub.s32 %s26, %s38
      %s44 = ssub.s32 %s40, %s42
      %s45 = sor.u32 %s43, %s44
      %p46 = scmp.eq.s32.totalorder %s45, 0
      %s48 = sadd.s32 %s47, 1
      %s49 = scalar_select %p46, %s47, %s48
      %p52 = pneg %p46
      %p53 = scmp.eq.s32.totalorder %s19, 3
      %p54 = por %p52, %p53
      %p55 = scmp.ne.s32.totalorder %s47, %s50
      %p56 = scmp.eq.s32.totalorder %s19, 0
      %p57 = por %p55, %p56
      %p58 = scmp.ne.s32.totalorder %s47, %s50
      %p59 = scmp.eq.s32.totalorder %s24, 3
      %p60 = por %p58, %p59
      %p61 = scmp.ne.s32.totalorder %s50, %s51
      %p62 = scmp.eq.s32.totalorder %s24, 0
      %p63 = por %p61, %p62
      %p64 = scmp.ne.s32.totalorder %s50, %s51
      %p65 = scmp.eq.s32.totalorder %s25, 3
      %p66 = por %p64, %p65
      %p68 = scmp.ne.s32.totalorder %s51, %s67
      %p69 = scmp.eq.s32.totalorder %s25, 0
      %p70 = por %p68, %p69
      %s72 = sadd.s32 %s71, 1
      %p75 = scmp.eq.s32.totalorder %s19, 3
      %p76 = scmp.ne.s32.totalorder %s71, %s73
      %p77 = scmp.eq.s32.totalorder %s19, 0
      %p78 = por %p76, %p77
      %p79 = scmp.ne.s32.totalorder %s71, %s73
      %p80 = scmp.eq.s32.totalorder %s24, 3
      %p81 = por %p79, %p80
      %p82 = scmp.ne.s32.totalorder %s73, %s74
      %p83 = scmp.eq.s32.totalorder %s24, 0
      %p84 = por %p82, %p83
      %p85 = scmp.ne.s32.totalorder %s73, %s74
      %p86 = scmp.eq.s32.totalorder %s25, 3
      %p87 = por %p85, %p86
      %p89 = scmp.ne.s32.totalorder %s74, %s88
      %p90 = scmp.eq.s32.totalorder %s25, 0
      %p91 = por %p89, %p90
      %s93 = sadd.s32 %s92, 1
      %p96 = scmp.eq.s32.totalorder %s19, 3
      %p97 = scmp.ne.s32.totalorder %s92, %s94
      %p98 = scmp.eq.s32.totalorder %s19, 0
      %p99 = por %p97, %p98
      %p100 = scmp.ne.s32.totalorder %s92, %s94
      %p101 = scmp.eq.s32.totalorder %s24, 3
      %p102 = por %p100, %p101
      %p103 = scmp.ne.s32.totalorder %s94, %s95
      %p104 = scmp.eq.s32.totalorder %s24, 0
      %p105 = por %p103, %p104
      %p106 = scmp.ne.s32.totalorder %s94, %s95
      %p107 = scmp.eq.s32.totalorder %s25, 3
      %p108 = por %p106, %p107
      %p110 = scmp.ne.s32.totalorder %s95, %s109
      %p111 = scmp.eq.s32.totalorder %s25, 0
      %p112 = por %p110, %p111
      %s114 = sadd.s32 %s113, 1
      %p117 = scmp.eq.s32.totalorder %s19, 3
      %p118 = scmp.ne.s32.totalorder %s113, %s115
      %p119 = scmp.eq.s32.totalorder %s19, 0
      %p120 = por %p118, %p119
      %p121 = scmp.ne.s32.totalorder %s113, %s115
      %p122 = scmp.eq.s32.totalorder %s24, 3
      %p123 = por %p121, %p122
      %p124 = scmp.ne.s32.totalorder %s115, %s116
      %p125 = scmp.eq.s32.totalorder %s24, 0
      %p126 = por %p124, %p125
      %p127 = scmp.ne.s32.totalorder %s115, %s116
      %p128 = scmp.eq.s32.totalorder %s25, 3
      %p129 = por %p127, %p128
      %p131 = scmp.ne.s32.totalorder %s116, %s130
      %p132 = scmp.eq.s32.totalorder %s25, 0
      %p133 = por %p131, %p132
      %s135 = sadd.s32 %s134, 1
      %p138 = scmp.eq.s32.totalorder %s19, 3
      %p139 = scmp.ne.s32.totalorder %s134, %s136
      %p140 = scmp.eq.s32.totalorder %s19, 0
      %p141 = por %p139, %p140
      %p142 = scmp.ne.s32.totalorder %s134, %s136
      %p143 = scmp.eq.s32.totalorder %s24, 3
      %p144 = por %p142, %p143
      %p145 = scmp.ne.s32.totalorder %s136, %s137
      %p146 = scmp.eq.s32.totalorder %s24, 0
      %p147 = por %p145, %p146
      %p148 = scmp.ne.s32.totalorder %s136, %s137
      %p149 = scmp.eq.s32.totalorder %s25, 3
      %p150 = por %p148, %p149
      %p152 = scmp.ne.s32.totalorder %s137, %s151
      %p153 = scmp.eq.s32.totalorder %s25, 0
      %p154 = por %p152, %p153
      %s156 = sadd.s32 %s155, 1
      %p159 = scmp.eq.s32.totalorder %s19, 3
      %p160 = scmp.ne.s32.totalorder %s155, %s157
      %p161 = scmp.eq.s32.totalorder %s19, 0
      %p162 = por %p160, %p161
      %p163 = scmp.ne.s32.totalorder %s155, %s157
      %p164 = scmp.eq.s32.totalorder %s24, 3
      %p165 = por %p163, %p164
      %p166 = scmp.ne.s32.totalorder %s157, %s158
      %p167 = scmp.eq.s32.totalorder %s24, 0
      %p168 = por %p166, %p167
      %p169 = scmp.ne.s32.totalorder %s157, %s158
      %p170 = scmp.eq.s32.totalorder %s25, 3
      %p171 = por %p169, %p170
      %p173 = scmp.ne.s32.totalorder %s158, %s172
      %p174 = scmp.eq.s32.totalorder %s25, 0
      %p175 = por %p173, %p174
      %s176 = ssub.s32 %s26, %s38
      %s177 = ssub.s32 %s27, %s34
      %s178 = sor.u32 %s176, %s177
      %p179 = scmp.eq.s32.totalorder %s178, 0
      %s181 = sadd.s32 %s180, 1
      %s182 = scalar_select %p179, %s180, %s181
      %p185 = pneg %p179
      %p186 = scmp.eq.s32.totalorder %s19, 3
      %p187 = por %p185, %p186
      %p188 = scmp.ne.s32.totalorder %s180, %s183
      %p189 = scmp.eq.s32.totalorder %s19, 0
      %p190 = por %p188, %p189
      %p191 = scmp.ne.s32.totalorder %s180, %s183
      %p192 = scmp.eq.s32.totalorder %s24, 3
      %p193 = por %p191, %p192
      %p194 = scmp.ne.s32.totalorder %s183, %s184
      %p195 = scmp.eq.s32.totalorder %s24, 0
      %p196 = por %p194, %p195
      %p197 = scmp.ne.s32.totalorder %s183, %s184
      %p198 = scmp.eq.s32.totalorder %s25, 3
      %p199 = por %p197, %p198
      %p201 = scmp.ne.s32.totalorder %s184, %s200
      %p202 = scmp.eq.s32.totalorder %s25, 0
      %p203 = por %p201, %p202
      %p204 = scmp.le.s32.totalorder 1, %s19
      %p205 = scmp.lt.s32.totalorder %s19, 5
      %p206 = pnand %p204, %p205
      %p207 = pneg %p206
      // Predicated region
      $region9: #{tpu_custom_call.1} parent=5 // pred_check
        _
      $region10: #{tpu_custom_call.1} parent=5 // pred_check_branch
        %209 = sbr.rel (%p206) target = $region12
      $region11: #{tpu_custom_call.1} parent=5 // pred_region
        %s210 = ssub.s32 %s19, 1
        // Predicated region
        $region13: #{tpu_custom_call.1} parent=11 // pred_check
          %p211 = pneg %p84
        $region14: #{tpu_custom_call.1} parent=11 // pred_check_branch
          %213 = sbr.rel (%p211) target = $region16
        $region15: #{tpu_custom_call.1} parent=11 // pred_region
          %s215 = ssub.s32 4096, 4096
          %216 = vsyncadd [#allocation7], %s215
          %s217 = sshll.u32 [#allocation6], 4
          %s218 = int_to_ptr.vmem [resolvable:$true] %s217
          %223 = dma.hbm_to_vmem [thread:$0]  %s1, 4096, %s218, [#allocation7], 128, 128, 8
        $region16: #{tpu_custom_call.1} parent=11 // pred_fallthru
          _
        // Predicated region
        $region17: #{tpu_custom_call.1} parent=11 // pred_check
          %p224 = pneg %p105
        $region18: #{tpu_custom_call.1} parent=11 // pred_check_branch
          %226 = sbr.rel (%p224) target = $region20
        $region19: #{tpu_custom_call.1} parent=11 // pred_region
          _
        $region20: #{tpu_custom_call.1} parent=11 // pred_fallthru
          _
        // Predicated region
        $region21: #{tpu_custom_call.1} parent=11 // pred_check
          %p227 = pneg %p126
        $region22: #{tpu_custom_call.1} parent=11 // pred_check_branch
          %229 = sbr.rel (%p227) target = $region24
        $region23: #{tpu_custom_call.1} parent=11 // pred_region
          _
        $region24: #{tpu_custom_call.1} parent=11 // pred_fallthru
          _
        // Predicated region
        $region25: #{tpu_custom_call.1} parent=11 // pred_check
          %p230 = pneg %p147
        $region26: #{tpu_custom_call.1} parent=11 // pred_check_branch
          %232 = sbr.rel (%p230) target = $region28
        $region27: #{tpu_custom_call.1} parent=11 // pred_region
          _
        $region28: #{tpu_custom_call.1} parent=11 // pred_fallthru
          _
        // Predicated region
        $region29: #{tpu_custom_call.1} parent=11 // pred_check
          %p233 = pneg %p168
        $region30: #{tpu_custom_call.1} parent=11 // pred_check_branch
          %235 = sbr.rel (%p233) target = $region32
        $region31: #{tpu_custom_call.1} parent=11 // pred_region
          %s237 = ssub.s32 4096, 4096
          %238 = vsyncadd [#allocation7], %s237
          %s239 = sshll.u32 [#allocation8], 4
          %s240 = int_to_ptr.vmem [resolvable:$true] %s239
          %245 = dma.hbm_to_vmem [thread:$0]  %s5, 4096, %s240, [#allocation7], 256, 256, 16
        $region32: #{tpu_custom_call.1} parent=11 // pred_fallthru
          _
      $region12: #{tpu_custom_call.1} parent=5 // pred_fallthru
        _
      %p246 = scmp.lt.s32.totalorder %s19, 4
      // Predicated region
      $region33: #{tpu_custom_call.1} parent=5 // pred_check
        %p247 = pneg %p246
      $region34: #{tpu_custom_call.1} parent=5 // pred_check_branch
        %249 = sbr.rel (%p247) target = $region36
      $region35: #{tpu_custom_call.1} parent=5 // pred_region
        // Predicated region
        $region37: #{tpu_custom_call.1} parent=35 // pred_check
          %p250 = pneg %p57
        $region38: #{tpu_custom_call.1} parent=35 // pred_check_branch
          %252 = sbr.rel (%p250) target = $region40
        $region39: #{tpu_custom_call.1} parent=35 // pred_region
          %s253 = sand.u32 %s47, 1
          %s254 = scalar_lea.sflag [#allocation4], %s253
          %s255 = sand.u32 %s47, 1
          %s256 = smul.addr %s255, 32
          %s257 = scalar_lea.vmem [#allocation3], %s256
          %p258 = scmp.lt.s32.totalorder %s27, 0
          %s259 = scalar_select %p258, %s27, 0
          %s260 = smul.u32 2, %s259
          %s262 = ssub.s32 512, 512
          %263 = vsyncadd %s254, %s262
          %s264 = smul.addr %s260, 2
          %s265 = smul.addr %s26, 4
          %s266 = sadd.s32 %s264, %s265
          %s267 = smul.addr %s266, 128
          %s268 = scalar_lea.hbm %s0, %s267
          %s269 = sshll.u32 %s257, 4
          %s270 = int_to_ptr.vmem [resolvable:$true] %s269
          %275 = dma.hbm_to_vmem [thread:$0]  %s268, 512, %s270, %s254, 256, 256, 16
        $region40: #{tpu_custom_call.1} parent=35 // pred_fallthru
          _
      $region36: #{tpu_custom_call.1} parent=5 // pred_fallthru
        _
      %p276 = scmp.le.s32.totalorder 1, %s19
      %p277 = scmp.lt.s32.totalorder %s19, 5
      %p278 = pnand %p276, %p277
      %p279 = pneg %p278
      // Predicated region
      $region41: #{tpu_custom_call.1} parent=5 // pred_check
        _
      $region42: #{tpu_custom_call.1} parent=5 // pred_check_branch
        %281 = sbr.rel (%p278) target = $region44
      $region43: #{tpu_custom_call.1} parent=5 // pred_region
        %s282 = ssub.s32 %s19, 1
        %s283 = sand.u32 %s50, 1
        %s284 = scalar_lea.sflag [#allocation4], %s283
        %s285 = sand.u32 %s50, 1
        %s286 = smul.addr %s285, 32
        %s287 = scalar_lea.vmem [#allocation3], %s286
        // Predicated region
        $region45: #{tpu_custom_call.1} parent=43 // pred_check
          %p288 = pneg %p63
        $region46: #{tpu_custom_call.1} parent=43 // pred_check_branch
          %290 = sbr.rel (%p288) target = $region48
        $region47: #{tpu_custom_call.1} parent=43 // pred_region
          %291 = dma.done %s284, 512
        $region48: #{tpu_custom_call.1} parent=43 // pred_fallthru
          _
        // Predicated region
        $region49: #{tpu_custom_call.1} parent=43 // pred_check
          %p292 = pneg %p84
        $region50: #{tpu_custom_call.1} parent=43 // pred_check_branch
          %294 = sbr.rel (%p292) target = $region52
        $region51: #{tpu_custom_call.1} parent=43 // pred_region
          %295 = dma.done [#allocation7], 4096
        $region52: #{tpu_custom_call.1} parent=43 // pred_fallthru
          _
        // Predicated region
        $region53: #{tpu_custom_call.1} parent=43 // pred_check
          %p296 = pneg %p168
        $region54: #{tpu_custom_call.1} parent=43 // pred_check_branch
          %298 = sbr.rel (%p296) target = $region56
        $region55: #{tpu_custom_call.1} parent=43 // pred_region
          %299 = dma.done [#allocation7], 4096
        $region56: #{tpu_custom_call.1} parent=43 // pred_fallthru
          _
        %s300 = sand.u32 %s50, 1
        %s301 = scalar_lea.sflag [#allocation4], %s300
        %s302 = sand.u32 %s50, 1
        %s303 = smul.addr %s302, 32
        %s304 = scalar_lea.vmem [#allocation3], %s303
        %p305 = pneg %p63
        %p306 = pneg %p60
        %p307 = pneg %p84
        %p308 = pneg %p81
        %p309 = pneg %p105
        %p310 = pneg %p102
        %p311 = pneg %p126
        %p312 = pneg %p123
        %p313 = pneg %p147
        %p314 = pneg %p144
        %p315 = pneg %p168
        %p316 = pneg %p165
        %p317 = pneg %p196
        %p318 = pneg %p193
        %s319 = sand.u32 %s183, 1
        %s320 = scalar_lea.sflag [#allocation5], %s319
        %s321 = sand.u32 %s183, 1
        %s322 = smul.addr %s321, 32
        %s323 = scalar_lea.vmem [#allocation9], %s322
        %p324 = scmp.lt.s32.totalorder %s29, 0
        %s325 = scalar_select %p324, %s29, 0
        %s326 = smul.u32 2, %s325
        %s327 = smul.u32 2, %s29
        %p328 = scmp.eq.s32.totalorder %s29, 0
        // Predicated region
        $region57: #{tpu_custom_call.1} parent=43 // pred_check
          %p329 = pneg %p328
        $region58: #{tpu_custom_call.1} parent=43 // pred_check_branch
          %331 = sbr.rel (%p329) target = $region60
        $region59: #{tpu_custom_call.1} parent=43 // pred_region
          %332 = vst [vmem:[#allocation2] sm:$0xff] 0.0
          %333 = vst [vmem:[#allocation2 + $0x8] sm:$0xff] 0.0
        $region60: #{tpu_custom_call.1} parent=43 // pred_fallthru
          _
        %p334 = scmp.lt.s32.totalorder %s29, 1
        // Predicated region
        $region61: #{tpu_custom_call.1} parent=43 // pred_check
          %p335 = pneg %p334
        $region62: #{tpu_custom_call.1} parent=43 // pred_check_branch
          %337 = sbr.rel (%p335) target = $region64
        $region63: #{tpu_custom_call.1} parent=43 // pred_region
          %v338 = vld [vmem:[%s287] sm:$0xff]
          %v339 = vld [vmem:[%s287 + $0x8] sm:$0xff]
          %v340 = vld [vmem:[%s287 + $0x10] sm:$0xff]
          %v341 = vld [vmem:[%s287 + $0x18] sm:$0xff]
          %342 = vst [vmem:[%s323] sm:$0xff] %v338
          %343 = vst [vmem:[%s323 + $0x8] sm:$0xff] %v339
          %344 = vst [vmem:[%s323 + $0x10] sm:$0xff] %v340
          %345 = vst [vmem:[%s323 + $0x18] sm:$0xff] %v341
          %v346 = vld [vmem:[#allocation6] sm:$0xff]
          %v347 = vld [vmem:[#allocation6 + $0x8] sm:$0xff]
          %v348 = vld [vmem:[#allocation6 + $0x10] sm:$0xff]
          %v349 = vld [vmem:[#allocation6 + $0x18] sm:$0xff]
          %v350 = vld [vmem:[#allocation6 + $0x20] sm:$0xff]
          %v351 = vld [vmem:[#allocation6 + $0x28] sm:$0xff]
          %v352 = vld [vmem:[#allocation6 + $0x30] sm:$0xff]
          %v353 = vld [vmem:[#allocation6 + $0x38] sm:$0xff]
          %v354 = vld [vmem:[#allocation6 + $0x40] sm:$0xff]
          %v355 = vld [vmem:[#allocation6 + $0x48] sm:$0xff]
          %v356 = vld [vmem:[#allocation6 + $0x50] sm:$0xff]
          %v357 = vld [vmem:[#allocation6 + $0x58] sm:$0xff]
          %v358 = vld [vmem:[#allocation6 + $0x60] sm:$0xff]
          %v359 = vld [vmem:[#allocation6 + $0x68] sm:$0xff]
          %v360 = vld [vmem:[#allocation6 + $0x70] sm:$0xff]
          %v361 = vld [vmem:[#allocation6 + $0x78] sm:$0xff]
          %v362 = vld [vmem:[#allocation6 + $0x80] sm:$0xff]
          %v363 = vld [vmem:[#allocation6 + $0x88] sm:$0xff]
          %v364 = vld [vmem:[#allocation6 + $0x90] sm:$0xff]
          %v365 = vld [vmem:[#allocation6 + $0x98] sm:$0xff]
          %v366 = vld [vmem:[#allocation6 + $0xa0] sm:$0xff]
          %v367 = vld [vmem:[#allocation6 + $0xa8] sm:$0xff]
          %v368 = vld [vmem:[#allocation6 + $0xb0] sm:$0xff]
          %v369 = vld [vmem:[#allocation6 + $0xb8] sm:$0xff]
          %v370 = vld [vmem:[#allocation6 + $0xc0] sm:$0xff]
          %v371 = vld [vmem:[#allocation6 + $0xc8] sm:$0xff]
          %v372 = vld [vmem:[#allocation6 + $0xd0] sm:$0xff]
          %v373 = vld [vmem:[#allocation6 + $0xd8] sm:$0xff]
          %v374 = vld [vmem:[#allocation6 + $0xe0] sm:$0xff]
          %v375 = vld [vmem:[#allocation6 + $0xe8] sm:$0xff]
          %v376 = vld [vmem:[#allocation6 + $0xf0] sm:$0xff]
          %v377 = vld [vmem:[#allocation6 + $0xf8] sm:$0xff]
          %378 = vmatprep.subr.mxu0 0.0
          %379 = vmatpush1.msra.mxu0 %v346
          %380 = vmatprep.subr.mxu0 0.0
          %381 = vmatpush1.msra.mxu0 %v347
          %382 = vmatprep.subr.mxu0 0.0
          %383 = vmatpush1.msra.mxu0 %v348
          %384 = vmatprep.subr.mxu0 0.0
          %385 = vmatpush1.msra.mxu0 %v349
          %386 = vmatprep.subr.mxu0 0.0
          %387 = vmatpush1.msra.mxu0 %v350
          %388 = vmatprep.subr.mxu0 0.0
          %389 = vmatpush1.msra.mxu0 %v351
          %390 = vmatprep.subr.mxu0 0.0
          %391 = vmatpush1.msra.mxu0 %v352
          %392 = vmatprep.subr.mxu0 0.0
          %393 = vmatpush1.msra.mxu0 %v353
          %394 = vmatprep.subr.mxu0 0.0
          %395 = vmatpush1.msra.mxu0 %v354
          %396 = vmatprep.subr.mxu0 0.0
          %397 = vmatpush1.msra.mxu0 %v355
          %398 = vmatprep.subr.mxu0 0.0
          %399 = vmatpush1.msra.mxu0 %v356
          %400 = vmatprep.subr.mxu0 0.0
          %401 = vmatpush1.msra.mxu0 %v357
          %402 = vmatprep.subr.mxu0 0.0
          %403 = vmatpush1.msra.mxu0 %v358
          %404 = vmatprep.subr.mxu0 0.0
          %405 = vmatpush1.msra.mxu0 %v359
          %406 = vmatprep.subr.mxu0 0.0
          %407 = vmatpush1.msra.mxu0 %v360
          %408 = vmatprep.subr.mxu0 0.0
          %409 = vmatpush1.msra.mxu0 %v361
          %410 = vmatprep.subr.mxu0 0.0
          %411 = vmatpush1.msra.mxu0 %v362
          %412 = vmatprep.subr.mxu0 0.0
          %413 = vmatpush1.msra.mxu0 %v363
          %414 = vmatprep.subr.mxu0 0.0
          %415 = vmatpush1.msra.mxu0 %v364
          %416 = vmatprep.subr.mxu0 0.0
          %417 = vmatpush1.msra.mxu0 %v365
          %418 = vmatprep.subr.mxu0 0.0
          %419 = vmatpush1.msra.mxu0 %v366
          %420 = vmatprep.subr.mxu0 0.0
          %421 = vmatpush1.msra.mxu0 %v367
          %422 = vmatprep.subr.mxu0 0.0
          %423 = vmatpush1.msra.mxu0 %v368
          %424 = vmatprep.subr.mxu0 0.0
          %425 = vmatpush1.msra.mxu0 %v369
          %426 = vmatprep.subr.mxu0 0.0
          %427 = vmatpush1.msra.mxu0 %v370
          %428 = vmatprep.subr.mxu0 0.0
          %429 = vmatpush1.msra.mxu0 %v371
          %430 = vmatprep.subr.mxu0 0.0
          %431 = vmatpush1.msra.mxu0 %v372
          %432 = vmatprep.subr.mxu0 0.0
          %433 = vmatpush1.msra.mxu0 %v373
          %434 = vmatprep.subr.mxu0 0.0
          %435 = vmatpush1.msra.mxu0 %v374
          %436 = vmatprep.subr.mxu0 0.0
          %437 = vmatpush1.msra.mxu0 %v375
          %438 = vmatprep.subr.mxu0 0.0
          %439 = vmatpush1.msra.mxu0 %v376
          %440 = vmatprep.subr.mxu0 0.0
          %441 = vmatpush1.msra.mxu0 %v377
          %442 = vmatprep.mubr.f32.mxu0 %v339
          %443 = vmatmul.mubr.f32.gmra.mrb[0].mxu0 %v338
          %v444 = vpop.f32.mrb[0].mxu0
          %v445 = vadd.f32 0.0, %v444
          %v446 = vpop.f32.mrb[0].mxu0
          %447 = vmatprep.mubr.f32.mxu0 %v341
          %448 = vmatmul.mubr.f32.gmra.mrb[0].mxu0 %v340
          %v449 = vpop.f32.mrb[0].mxu0
          %v450 = vadd.f32 0.0, %v449
          %v451 = vpop.f32.mrb[0].mxu0
          %452 = vdwg.mxu0
          %s453 = smul.u32 %s29, 16
          %s454 = scalar_lea.vmem %s2, %s453
          %v455 = vld [vmem:[%s454] sm:$0xff]
          %v456 = vld [vmem:[%s454 + $0x8] sm:$0xff]
          %v457 = vld [vmem:[#allocation2] sm:$0xff]
          %v458 = vld [vmem:[#allocation2 + $0x8] sm:$0xff]
          %459 = vxpose.xlu0.b32.start [1/16] %v455, 128
          %460 = vxpose.xlu0.b32.cont [2/16] %v456, 128
          %461 = vxpose.xlu0.b32.cont [3/16] 0.0, 128
          %462 = vxpose.xlu0.b32.cont [4/16] 0.0, 128
          %463 = vxpose.xlu0.b32.cont [5/16] 0.0, 128
          %464 = vxpose.xlu0.b32.cont [6/16] 0.0, 128
          %465 = vxpose.xlu0.b32.cont [7/16] 0.0, 128
          %466 = vxpose.xlu0.b32.cont [8/16] 0.0, 128
          %467 = vxpose.xlu0.b32.cont [9/16] 0.0, 128
          %468 = vxpose.xlu0.b32.cont [10/16] 0.0, 128
          %469 = vxpose.xlu0.b32.cont [11/16] 0.0, 128
          %470 = vxpose.xlu0.b32.cont [12/16] 0.0, 128
          %471 = vxpose.xlu0.b32.cont [13/16] 0.0, 128
          %472 = vxpose.xlu0.b32.cont [14/16] 0.0, 128
          %473 = vxpose.xlu0.b32.cont [15/16] 0.0, 128
          %474 = vxpose.xlu0.b32.end [16/16] 0.0, 128
          %v475 = vpop.trf.xlu0
          %v476 = vpop.trf.xlu0
          %v477 = vpop.trf.xlu0
          %v478 = vpop.trf.xlu0
          %v479 = vpop.trf.xlu0
          %v480 = vpop.trf.xlu0
          %v481 = vpop.trf.xlu0
          %v482 = vpop.trf.xlu0
          %v483 = vpop.trf.xlu0
          %v484 = vpop.trf.xlu0
          %v485 = vpop.trf.xlu0
          %v486 = vpop.trf.xlu0
          %v487 = vpop.trf.xlu0
          %v488 = vpop.trf.xlu0
          %v489 = vpop.trf.xlu0
          %v490 = vpop.trf.xlu0
          %vm491 = vcmask 130048
          %v493 = vsel %vm491, %v475, 0
          %v496 = vsel %vm491, %v476, 0
          %498 = vmatprep.subr.mxu0 0.0
          %499 = vmatpush1.msra.mxu0 %v445
          %500 = vmatprep.subr.mxu0 0.0
          %501 = vmatpush1.msra.mxu0 %v450
          %502 = vmatprep.subr.mxu0 0.0
          %503 = vmatpush1.msra.mxu0 0.0
          %504 = vmatprep.subr.mxu0 0.0
          %505 = vmatpush1.msra.mxu0 0.0
          %506 = vmatprep.subr.mxu0 0.0
          %507 = vmatpush1.msra.mxu0 0.0
          %508 = vmatprep.subr.mxu0 0.0
          %509 = vmatpush1.msra.mxu0 0.0
          %510 = vmatprep.subr.mxu0 0.0
          %511 = vmatpush1.msra.mxu0 0.0
          %512 = vmatprep.subr.mxu0 0.0
          %513 = vmatpush1.msra.mxu0 0.0
          %514 = vmatprep.subr.mxu0 0.0
          %515 = vmatpush1.msra.mxu0 0.0
          %516 = vmatprep.subr.mxu0 0.0
          %517 = vmatpush1.msra.mxu0 0.0
          %518 = vmatprep.subr.mxu0 0.0
          %519 = vmatpush1.msra.mxu0 0.0
          %520 = vmatprep.subr.mxu0 0.0
          %521 = vmatpush1.msra.mxu0 0.0
          %522 = vmatprep.subr.mxu0 0.0
          %523 = vmatpush1.msra.mxu0 0.0
          %524 = vmatprep.subr.mxu0 0.0
          %525 = vmatpush1.msra.mxu0 0.0
          %526 = vmatprep.subr.mxu0 0.0
          %527 = vmatpush1.msra.mxu0 0.0
          %528 = vmatprep.subr.mxu0 0.0
          %529 = vmatpush1.msra.mxu0 0.0
          %530 = vmatprep.subr.mxu0 0.0
          %531 = vmatpush1.msra.mxu0 0.0
          %532 = vmatprep.subr.mxu0 0.0
          %533 = vmatpush1.msra.mxu0 0.0
          %534 = vmatprep.subr.mxu0 0.0
          %535 = vmatpush1.msra.mxu0 0.0
          %536 = vmatprep.subr.mxu0 0.0
          %537 = vmatpush1.msra.mxu0 0.0
          %538 = vmatprep.subr.mxu0 0.0
          %539 = vmatpush1.msra.mxu0 0.0
          %540 = vmatprep.subr.mxu0 0.0
          %541 = vmatpush1.msra.mxu0 0.0
          %542 = vmatprep.subr.mxu0 0.0
          %543 = vmatpush1.msra.mxu0 0.0
          %544 = vmatprep.subr.mxu0 0.0
          %545 = vmatpush1.msra.mxu0 0.0
          %546 = vmatprep.subr.mxu0 0.0
          %547 = vmatpush1.msra.mxu0 0.0
          %548 = vmatprep.subr.mxu0 0.0
          %549 = vmatpush1.msra.mxu0 0.0
          %550 = vmatprep.subr.mxu0 0.0
          %551 = vmatpush1.msra.mxu0 0.0
          %552 = vmatprep.subr.mxu0 0.0
          %553 = vmatpush1.msra.mxu0 0.0
          %554 = vmatprep.subr.mxu0 0.0
          %555 = vmatpush1.msra.mxu0 0.0
          %556 = vmatprep.subr.mxu0 0.0
          %557 = vmatpush1.msra.mxu0 0.0
          %558 = vmatprep.subr.mxu0 0.0
          %559 = vmatpush1.msra.mxu0 0.0
          %560 = vmatprep.subr.mxu0 0.0
          %561 = vmatpush1.msra.mxu0 0.0
          %562 = vmatprep.mubr.f32.mxu0 0.0
          %563 = vmatmul.mubr.f32.gmra.mrb[0].mxu0 %v493
          %v564 = vpop.f32.mrb[0].mxu0
          %v565 = vadd.f32 0.0, %v564
          %v566 = vpop.f32.mrb[0].mxu0
          %567 = vmatprep.mubr.f32.mxu0 0.0
          %568 = vmatmul.mubr.f32.gmra.mrb[0].mxu0 %v496
          %v569 = vpop.f32.mrb[0].mxu0
          %v570 = vadd.f32 0.0, %v569
          %v571 = vpop.f32.mrb[0].mxu0
          %572 = vdwg.mxu0
          %v573 = vadd.f32 %v457, %v565
          %v574 = vadd.f32 %v458, %v570
          %575 = vst [vmem:[#allocation2] sm:$0xff] %v573
          %576 = vst [vmem:[#allocation2 + $0x8] sm:$0xff] %v574
        $region64: #{tpu_custom_call.1} parent=43 // pred_fallthru
          _
        %p577 = scmp.ge.s32.totalorder %s29, 1
        // Predicated region
        $region65: #{tpu_custom_call.1} parent=43 // pred_check
          %p578 = pneg %p577
        $region66: #{tpu_custom_call.1} parent=43 // pred_check_branch
          %580 = sbr.rel (%p578) target = $region68
        $region67: #{tpu_custom_call.1} parent=43 // pred_region
          %s581 = ssub.s32 %s29, 1
          %s582 = smul.u32 %s581, 16
          %s583 = scalar_lea.vmem [#allocation2], %s582
          %v584 = vld [vmem:[%s583] sm:$0xff]
          %v585 = vld [vmem:[%s583 + $0x8] sm:$0xff]
          %s586 = scalar_lea.vmem %s3, %s582
          %v587 = vld [vmem:[%s586] sm:$0xff]
          %v588 = vld [vmem:[%s586 + $0x8] sm:$0xff]
          %590 = vset.pattern.permute.xlu0 0
          %591 = vperm.xlu0 %590, %v587
          %v592 = vpop.permute.xlu0 %591
          %595 = vset.pattern.permute.xlu0 0
          %596 = vperm.xlu0 %595, %v588
          %v597 = vpop.permute.xlu0 %596
          %v599 = vadd.f32 %v584, %v592
          %v600 = vadd.f32 %v585, %v597
          %v601 = vmax.f32 %v599, 0.0
          %v602 = vmax.f32 %v600, 0.0
          %s603 = scalar_lea.vmem %s4, %s582
          %v604 = vld [vmem:[%s603] sm:$0xff]
          %v605 = vld [vmem:[%s603 + $0x8] sm:$0xff]
          %v606 = vmul.f32 %v601, %v604
          %v607 = vmul.f32 %v602, %v605
          %v608 = vld [vmem:[#allocation8] sm:$0xff]
          %v609 = vld [vmem:[#allocation8 + $0x8] sm:$0xff]
          %v610 = vld [vmem:[#allocation8 + $0x10] sm:$0xff]
          %v611 = vld [vmem:[#allocation8 + $0x18] sm:$0xff]
          %v612 = vld [vmem:[#allocation8 + $0x20] sm:$0xff]
          %v613 = vld [vmem:[#allocation8 + $0x28] sm:$0xff]
          %v614 = vld [vmem:[#allocation8 + $0x30] sm:$0xff]
          %v615 = vld [vmem:[#allocation8 + $0x38] sm:$0xff]
          %v616 = vld [vmem:[#allocation8 + $0x40] sm:$0xff]
          %v617 = vld [vmem:[#allocation8 + $0x48] sm:$0xff]
          %v618 = vld [vmem:[#allocation8 + $0x50] sm:$0xff]
          %v619 = vld [vmem:[#allocation8 + $0x58] sm:$0xff]
          %v620 = vld [vmem:[#allocation8 + $0x60] sm:$0xff]
          %v621 = vld [vmem:[#allocation8 + $0x68] sm:$0xff]
          %v622 = vld [vmem:[#allocation8 + $0x70] sm:$0xff]
          %v623 = vld [vmem:[#allocation8 + $0x78] sm:$0xff]
          %v624 = vld [vmem:[#allocation8 + $0x80] sm:$0xff]
          %v625 = vld [vmem:[#allocation8 + $0x88] sm:$0xff]
          %v626 = vld [vmem:[#allocation8 + $0x90] sm:$0xff]
          %v627 = vld [vmem:[#allocation8 + $0x98] sm:$0xff]
          %v628 = vld [vmem:[#allocation8 + $0xa0] sm:$0xff]
          %v629 = vld [vmem:[#allocation8 + $0xa8] sm:$0xff]
          %v630 = vld [vmem:[#allocation8 + $0xb0] sm:$0xff]
          %v631 = vld [vmem:[#allocation8 + $0xb8] sm:$0xff]
          %v632 = vld [vmem:[#allocation8 + $0xc0] sm:$0xff]
          %v633 = vld [vmem:[#allocation8 + $0xc8] sm:$0xff]
          %v634 = vld [vmem:[#allocation8 + $0xd0] sm:$0xff]
          %v635 = vld [vmem:[#allocation8 + $0xd8] sm:$0xff]
          %v636 = vld [vmem:[#allocation8 + $0xe0] sm:$0xff]
          %v637 = vld [vmem:[#allocation8 + $0xe8] sm:$0xff]
          %v638 = vld [vmem:[#allocation8 + $0xf0] sm:$0xff]
          %v639 = vld [vmem:[#allocation8 + $0xf8] sm:$0xff]
          %640 = vmatprep.subr.mxu0 %v609
          %641 = vmatpush1.msra.mxu0 %v608
          %642 = vmatprep.subr.mxu0 %v611
          %643 = vmatpush1.msra.mxu0 %v610
          %644 = vmatprep.subr.mxu0 %v613
          %645 = vmatpush1.msra.mxu0 %v612
          %646 = vmatprep.subr.mxu0 %v615
          %647 = vmatpush1.msra.mxu0 %v614
          %648 = vmatprep.subr.mxu0 %v617
          %649 = vmatpush1.msra.mxu0 %v616
          %650 = vmatprep.subr.mxu0 %v619
          %651 = vmatpush1.msra.mxu0 %v618
          %652 = vmatprep.subr.mxu0 %v621
          %653 = vmatpush1.msra.mxu0 %v620
          %654 = vmatprep.subr.mxu0 %v623
          %655 = vmatpush1.msra.mxu0 %v622
          %656 = vmatprep.subr.mxu0 %v625
          %657 = vmatpush1.msra.mxu0 %v624
          %658 = vmatprep.subr.mxu0 %v627
          %659 = vmatpush1.msra.mxu0 %v626
          %660 = vmatprep.subr.mxu0 %v629
          %661 = vmatpush1.msra.mxu0 %v628
          %662 = vmatprep.subr.mxu0 %v631
          %663 = vmatpush1.msra.mxu0 %v630
          %664 = vmatprep.subr.mxu0 %v633
          %665 = vmatpush1.msra.mxu0 %v632
          %666 = vmatprep.subr.mxu0 %v635
          %667 = vmatpush1.msra.mxu0 %v634
          %668 = vmatprep.subr.mxu0 %v637
          %669 = vmatpush1.msra.mxu0 %v636
          %670 = vmatprep.subr.mxu0 %v639
          %671 = vmatpush1.msra.mxu0 %v638
          %672 = vmatprep.subr.mxu0 0.0
          %673 = vmatpush1.msra.mxu0 0.0
          %674 = vmatprep.subr.mxu0 0.0
          %675 = vmatpush1.msra.mxu0 0.0
          %676 = vmatprep.subr.mxu0 0.0
          %677 = vmatpush1.msra.mxu0 0.0
          %678 = vmatprep.subr.mxu0 0.0
          %679 = vmatpush1.msra.mxu0 0.0
          %680 = vmatprep.subr.mxu0 0.0
          %681 = vmatpush1.msra.mxu0 0.0
          %682 = vmatprep.subr.mxu0 0.0
          %683 = vmatpush1.msra.mxu0 0.0
          %684 = vmatprep.subr.mxu0 0.0
          %685 = vmatpush1.msra.mxu0 0.0
          %686 = vmatprep.subr.mxu0 0.0
          %687 = vmatpush1.msra.mxu0 0.0
          %688 = vmatprep.subr.mxu0 0.0
          %689 = vmatpush1.msra.mxu0 0.0
          %690 = vmatprep.subr.mxu0 0.0
          %691 = vmatpush1.msra.mxu0 0.0
          %692 = vmatprep.subr.mxu0 0.0
          %693 = vmatpush1.msra.mxu0 0.0
          %694 = vmatprep.subr.mxu0 0.0
          %695 = vmatpush1.msra.mxu0 0.0
          %696 = vmatprep.subr.mxu0 0.0
          %697 = vmatpush1.msra.mxu0 0.0
          %698 = vmatprep.subr.mxu0 0.0
          %699 = vmatpush1.msra.mxu0 0.0
          %700 = vmatprep.subr.mxu0 0.0
          %701 = vmatpush1.msra.mxu0 0.0
          %702 = vmatprep.subr.mxu0 0.0
          %703 = vmatpush1.msra.mxu0 0.0
          %704 = vmatprep.mubr.f32.mxu0 0.0
          %705 = vmatmul.mubr.f32.gmra.mrb[0].mxu0 %v606
          %v706 = vpop.f32.mrb[0].mxu0
          %v707 = vadd.f32 0.0, %v706
          %v708 = vpop.f32.mrb[0].mxu0
          %v709 = vadd.f32 0.0, %v708
          %710 = vmatprep.mubr.f32.mxu0 0.0
          %711 = vmatmul.mubr.f32.gmra.mrb[0].mxu0 %v607
          %v712 = vpop.f32.mrb[0].mxu0
          %v713 = vadd.f32 0.0, %v712
          %v714 = vpop.f32.mrb[0].mxu0
          %v715 = vadd.f32 0.0, %v714
          %716 = vdwg.mxu0
          %717 = vst [vmem:[%s323] sm:$0xff] %v707
          %718 = vst [vmem:[%s323 + $0x8] sm:$0xff] %v709
          %719 = vst [vmem:[%s323 + $0x10] sm:$0xff] %v713
          %720 = vst [vmem:[%s323 + $0x18] sm:$0xff] %v715
        $region68: #{tpu_custom_call.1} parent=43 // pred_fallthru
          _
        %s721 = sand.u32 %s183, 1
        %s722 = scalar_lea.sflag [#allocation5], %s721
        %s723 = sand.u32 %s183, 1
        %s724 = smul.addr %s723, 32
        %s725 = scalar_lea.vmem [#allocation9], %s724
        // Predicated region
        $region69: #{tpu_custom_call.1} parent=43 // pred_check
          %p726 = pneg %p193
        $region70: #{tpu_custom_call.1} parent=43 // pred_check_branch
          %728 = sbr.rel (%p726) target = $region72
        $region71: #{tpu_custom_call.1} parent=43 // pred_region
          %s729 = smul.u32 2, %s29
          %s731 = ssub.s32 512, 512
          %732 = vsyncadd %s722, %s731
          %s733 = smul.addr %s729, 2
          %s734 = smul.addr %s28, 8
          %s735 = sadd.s32 %s733, %s734
          %s736 = smul.addr %s735, 128
          %s737 = scalar_lea.hbm %s6, %s736
          %s738 = sshll.u32 %s725, 4
          %s739 = int_to_ptr.vmem [resolvable:$true] %s738
          %744 = dma.vmem_to_hbm [thread:$0]  %s739, 512, %s737, %s722, 256, 256, 16
        $region72: #{tpu_custom_call.1} parent=43 // pred_fallthru
          _
      $region44: #{tpu_custom_call.1} parent=5 // pred_fallthru
        _
      %p745 = scmp.le.s32.totalorder 2, %s19
      // Predicated region
      $region73: #{tpu_custom_call.1} parent=5 // pred_check
        %p746 = pneg %p745
      $region74: #{tpu_custom_call.1} parent=5 // pred_check_branch
        %748 = sbr.rel (%p746) target = $region76
      $region75: #{tpu_custom_call.1} parent=5 // pred_region
        %s749 = ssub.s32 %s19, 2
        // Predicated region
        $region77: #{tpu_custom_call.1} parent=75 // pred_check
          %p750 = pneg %p199
        $region78: #{tpu_custom_call.1} parent=75 // pred_check_branch
          %752 = sbr.rel (%p750) target = $region80
        $region79: #{tpu_custom_call.1} parent=75 // pred_region
          %s753 = sand.u32 %s184, 1
          %s754 = scalar_lea.sflag [#allocation5], %s753
          %s755 = sand.u32 %s184, 1
          %s756 = smul.addr %s755, 32
          %s757 = scalar_lea.vmem [#allocation9], %s756
          %758 = dma.done %s754, 512
        $region80: #{tpu_custom_call.1} parent=75 // pred_fallthru
          _
      $region76: #{tpu_custom_call.1} parent=5 // pred_fallthru
        _
    $region6: #{tpu_custom_call.1} parent=1 // loop_footer
      %s23 = sadd.s32 1, %s19
    $region7: #{tpu_custom_call.1} parent=1 // loop_footer_branch
      %18 = sbr.rel target = $region3
    $region8: #{tpu_custom_call.1} parent=1 // loop_exit
      _
    %759 = vsyncpa [#allocation4], 1
    %s760 = scalar_lea.sflag [#allocation4], 1
    %761 = vsyncpa %s760, 1
    %762 = vsyncpa [#allocation7], 1
    %763 = vsyncpa [#allocation5], 1
    %s764 = scalar_lea.sflag [#allocation5], 1
    %765 = vsyncpa %s764, 1

</llo_original>
